<compile_context>
chip_gen: v7x
topology: tpu7x:2x2x1
jax: 0.10.0
libtpu: 0.0.40
codegen_flags: <defaults>
</compile_context>

<pallas_src>
import functools

import jax
import jax.numpy as jnp
from jax.experimental import pallas as pl
from jax.experimental.pallas import tpu as pltpu

_LANE = 128
_SUBLANE = 8
_MIB = 1 << 20
_VMEM_BUDGET = 40 * _MIB       # target working set (fits v7x's 64 MiB VMEM per TC)
_VMEM_LIMIT_CAP = 64 * _MIB    # never request more than v7x physical VMEM


def _round_up(x, m):
    return (x + m - 1) // m * m


def _itemsize(dtype):
    return jnp.dtype(dtype).itemsize


# ----------------------------------------------------------------------------- kernels


def _resblock_fused_kernel(x_ref, w1_ref, b1_ref, w2_ref, b2_ref, o_ref, *, has_proj):
    """Whole block in one grid step.

    With a projected shortcut, w1_ref holds [W1 | Ws] fused along N (one wide MXU
    pass, split inside the kernel); otherwise the shortcut is the identity.
    """
    n = o_ref.shape[-1]
    x = x_ref[...]
    xc = x.astype(w1_ref.dtype)                       # bf16 (or f32) into the MXU
    h_full = jnp.dot(xc, w1_ref[...], preferred_element_type=jnp.float32) + b1_ref[...]
    if has_proj:
        h = jnp.maximum(h_full[:, :n], 0.0)           # fc1 branch
        identity = h_full[:, n:]                      # projected shortcut branch
    else:
        h = jnp.maximum(h_full, 0.0)
        identity = x.astype(jnp.float32)              # identity shortcut (K == N)
    out = jnp.dot(h.astype(w2_ref.dtype), w2_ref[...],
                  preferred_element_type=jnp.float32) + b2_ref[...]
    o_ref[...] = jnp.maximum(out + identity, 0.0).astype(o_ref.dtype)


def _resblock_tiled_kernel(*refs, has_proj):
    """N-tiled variant: grid = (batch_tiles, n_tiles).

    fc1 activations for the current batch tile are computed once (n_tile == 0) into a
    VMEM scratch and reused for every output-N tile; W2 / Ws / biases / output are
    blocked along N so nothing quadratic in N has to be resident.
    """
    x_ref, w1_ref, b1_ref, w2_ref, b2_ref = refs[:5]
    o_ref, h_ref = refs[-2:]
    nj = pl.program_id(1)

    @pl.when(nj == 0)
    def _():
        xc = x_ref[...].astype(w1_ref.dtype)
        h = jnp.dot(xc, w1_ref[...], preferred_element_type=jnp.float32) + b1_ref[...]
        h_ref[...] = jnp.maximum(h, 0.0).astype(h_ref.dtype)

    out = jnp.dot(h_ref[...], w2_ref[...],
                  preferred_element_type=jnp.float32) + b2_ref[...]
    if has_proj:
        ws_ref, bs_ref = refs[5], refs[6]
        identity = jnp.dot(x_ref[...].astype(ws_ref.dtype), ws_ref[...],
                           preferred_element_type=jnp.float32) + bs_ref[...]
    else:
        xid_ref = refs[5]                             # column-tile view of x (K == N)
        identity = xid_ref[...].astype(jnp.float32)
    o_ref[...] = jnp.maximum(out + identity, 0.0).astype(o_ref.dtype)


# ------------------------------------------------------------------- param preparation


def prepare_params(params, compute_dtype=jnp.bfloat16):
    """One-time prep (outside the hot path).

    Transpose (out,in)->(in,out), zero-pad feature dims to multiples of 128, fuse
    [W1 | Ws] along N, store weights in `compute_dtype` (bf16 by default -> f32 MXU
    accumulation), keep biases in f32.
    """
    w1, b1 = params["w1"], params["b1"]
    w2, b2 = params["w2"], params["b2"]
    out_dim, in_dim = w1.shape
    K = _round_up(in_dim, _LANE)
    N = _round_up(out_dim, _LANE)
    has_proj = "ws" in params
    assert has_proj or in_dim == out_dim

    def pad_w(w, rows, cols):                          # torch (out,in) -> padded (rows,cols)
        wt = w.T.astype(compute_dtype)
        return jnp.pad(wt, ((0, rows - wt.shape[0]), (0, cols - wt.shape[1])))

    def pad_b(b):
        return jnp.pad(b.astype(jnp.float32), (0, N - b.shape[0])).reshape(1, N)

    prepared = {
        "in_dim": in_dim, "out_dim": out_dim, "K": K, "N": N,
        "has_proj": has_proj, "compute_dtype": jnp.dtype(compute_dtype),
        "w2": pad_w(w2, N, N), "b2": pad_b(b2),
    }
    w1p, b1p = pad_w(w1, K, N), pad_b(b1)
    if has_proj:
        # [W1 | Ws]: one fused (K, 2N) operand.  The N-tiled path re-views the SAME
        # array as a resident W1 block plus streamed Ws column tiles (no extra copy).
        prepared["w1"] = jnp.concatenate([w1p, pad_w(params["ws"], K, N)], axis=1)
        prepared["b1"] = jnp.concatenate([b1p, pad_b(params["bs"])], axis=1)
    else:
        prepared["w1"] = w1p
        prepared["b1"] = b1p
    return prepared


# -------------------------------------------------------------------- tiling heuristics


def _pick_tb(batch):
    """Largest batch tile in {512..8} with <=~12.5% zero-row waste, then halved until
    the parallel batch axis has >=2 grid steps (keeps both v7x TensorCores busy)."""
    tb = _SUBLANE
    for t in (512, 256, 128, 64, 32, 16, 8):
        if ((-batch) % t) * 8 <= batch:
            tb = t
            break
    while tb > _SUBLANE and pl.cdiv(batch, tb) < 2:
        tb //= 2
    return tb


def _fused_vmem_bytes(tb, K, N, has_proj, wb, xb, ob):
    w1_cols = 2 * N if has_proj else N
    weights = (K * w1_cols + N * N) * wb + (w1_cols + N) * 4     # single-buffered
    stream = 2 * tb * K * xb + 2 * tb * N * ob                   # double-buffered x / out
    work = tb * w1_cols * 4 + tb * N * 4                         # f32 h_full + epilogue
    return weights + stream + work


def _tiled_vmem_bytes(tb, tn, K, N, has_proj, wb, xb, ob):
    res = K * N * wb + N * 4                                     # W1 + b1, single-buffered
    streamed = 2 * (N * tn * wb + tn * 4)                        # W2 / b2 tiles
    if has_proj:
        streamed += 2 * (K * tn * wb + tn * 4)                   # Ws / bs tiles
    else:
        streamed += 2 * tb * tn * xb                             # identity x column tiles
    streamed += 2 * tb * K * xb + 2 * tb * tn * ob               # x / out tiles
    scratch = tb * N * wb                                        # cached fc1 activations
    work = 2 * tb * tn * 4
    return res + streamed + scratch + work


def _vmem_limit(need_bytes):
    return int(min(max(need_bytes * 5 // 4 + 2 * _MIB, 32 * _MIB), _VMEM_LIMIT_CAP))


# ----------------------------------------------------------------------------- wrapper


def residual_block(x, prepared, *, n_tile=None, vmem_budget=_VMEM_BUDGET):
    """ResidualBlock forward with a fused Pallas kernel.

    x: (B, in_dim); prepared: output of prepare_params().  `n_tile` forces the
    N-tiled path with that output tile width (multiple of 128 dividing padded N).
    """
    B, in_dim = x.shape
    assert in_dim == prepared["in_dim"]
    K, N = prepared["K"], prepared["N"]
    out_dim = prepared["out_dim"]
    has_proj = prepared["has_proj"]
    w1, b1 = prepared["w1"], prepared["b1"]
    w2, b2 = prepared["w2"], prepared["b2"]

    if in_dim != K:                                    # zero-pad K only when needed
        x = jnp.pad(x, ((0, 0), (0, K - in_dim)))

    wb = _itemsize(prepared["compute_dtype"])
    xb = _itemsize(x.dtype)
    ob = xb
    TB = _pick_tb(B)
    nb = pl.cdiv(B, TB)                                # partial last block handled by grid

    flops = 2 * B * K * N + 2 * B * N * N + (2 * B * K * N if has_proj else 0)
    param_bytes = sum(int(a.size) * a.dtype.itemsize for a in (w1, b1, w2, b2))
    cost = pl.CostEstimate(flops=int(flops), transcendentals=0,
                           bytes_accessed=int(B * K * xb + B * N * ob + param_bytes))

    def resident(shape, imap):                         # constant index_map -> 1 buffer
        return pl.BlockSpec(shape, imap, pipeline_mode=pl.Buffered(buffer_count=1))

    out_shape = jax.ShapeDtypeStruct((B, N), x.dtype)

    fused_need = _fused_vmem_bytes(TB, K, N, has_proj, wb, xb, ob)
    use_fused = (n_tile is None or n_tile >= N) and fused_need <= vmem_budget

    if use_fused:
        w1_cols = 2 * N if has_proj else N
        kernel = functools.partial(_resblock_fused_kernel, has_proj=has_proj)
        y = pl.pallas_call(
            kernel,
            out_shape=out_shape,
            grid=(nb,),
            in_specs=[
                pl.BlockSpec((TB, K), lambda i: (i, 0)),
                resident((K, w1_cols), lambda i: (0, 0)),
                resident((1, w1_cols), lambda i: (0, 0)),
                resident((N, N), lambda i: (0, 0)),
                resident((1, N), lambda i: (0, 0)),
            ],
            out_specs=pl.BlockSpec((TB, N), lambda i: (i, 0)),
            compiler_params=pltpu.CompilerParams(
                dimension_semantics=("parallel",),
                vmem_limit_bytes=_vmem_limit(fused_need)),
            cost_estimate=cost,
        )(x, w1, b1, w2, b2)
    else:
        # Widest output tile (multiple of 128 dividing N) that fits the VMEM budget.
        if n_tile is not None:
            assert n_tile % _LANE == 0 and N % n_tile == 0
            TN = n_tile
        else:
            TN = _LANE
            for cand in (1024, 512, 256, 128):
                if cand <= N and N % cand == 0 and _tiled_vmem_bytes(
                        TB, cand, K, N, has_proj, wb, xb, ob) <= vmem_budget:
                    TN = cand
                    break
        while (_tiled_vmem_bytes(TB, TN, K, N, has_proj, wb, xb, ob) > vmem_budget
               and TB > 64):
            TB //= 2
        nb = pl.cdiv(B, TB)
        nn = N // TN
        tiled_need = _tiled_vmem_bytes(TB, TN, K, N, has_proj, wb, xb, ob)

        in_specs = [
            pl.BlockSpec((TB, K), lambda i, j: (i, 0)),
            resident((K, N), lambda i, j: (0, 0)),        # W1 (left half of [W1|Ws])
            resident((1, N), lambda i, j: (0, 0)),        # b1
            pl.BlockSpec((N, TN), lambda i, j: (0, j)),   # W2 column tile
            pl.BlockSpec((1, TN), lambda i, j: (0, j)),   # b2 tile
        ]
        args = [x, w1, b1, w2, b2]
        if has_proj:
            nblk = N // TN                                # Ws lives at columns [N, 2N)
            in_specs += [
                pl.BlockSpec((K, TN), lambda i, j: (0, nblk + j)),   # Ws tile
                pl.BlockSpec((1, TN), lambda i, j: (0, nblk + j)),   # bs tile
            ]
            args += [w1, b1]
        else:
            in_specs += [pl.BlockSpec((TB, TN), lambda i, j: (i, j))]  # identity tile of x
            args += [x]

        kernel = functools.partial(_resblock_tiled_kernel, has_proj=has_proj)
        y = pl.pallas_call(
            kernel,
            out_shape=out_shape,
            grid=(nb, nn),
            in_specs=in_specs,
            out_specs=pl.BlockSpec((TB, TN), lambda i, j: (i, j)),
            scratch_shapes=[pltpu.VMEM((TB, N), prepared["compute_dtype"])],
            compiler_params=pltpu.CompilerParams(
                dimension_semantics=("parallel", "arbitrary"),
                vmem_limit_bytes=_vmem_limit(tiled_need)),
            cost_estimate=cost,
        )(*args)

    # When chaining blocks, keep y in the padded (., N) layout and skip this slice.
    if N != out_dim:
        y = y[:, :out_dim]
    return y


# ---------------------------------------------------------------------- init / reference


def init_params(key, in_dim, out_dim):
    """Deterministic init mimicking nn.Linear's uniform(-1/sqrt(fan_in), +) shapes."""
    ks = jax.random.split(key, 6)

    def lin(kw, kb, fan_in, fan_out):
        bound = 1.0 / jnp.sqrt(fan_in)
        w = jax.random.uniform(kw, (fan_out, fan_in), jnp.float32, -bound, bound)
        b = jax.random.uniform(kb, (fan_out,), jnp.float32, -bound, bound)
        return w, b

    w1, b1 = lin(ks[0], ks[1], in_dim, out_dim)
    w2, b2 = lin(ks[2], ks[3], out_dim, out_dim)
    params = {"w1": w1, "b1": b1, "w2": w2, "b2": b2}
    if in_dim != out_dim:
        ws, bs = lin(ks[4], ks[5], in_dim, out_dim)
        params["ws"] = ws
        params["bs"] = bs
    return params


def residual_block_ref(x, params):
    """Pure-JAX reference (matches PyTorch ResidualBlock.forward)."""
    out = jnp.maximum(x @ params["w1"].T + params["b1"], 0.0)
    out = out @ params["w2"].T + params["b2"]
    identity = x @ params["ws"].T + params["bs"] if "ws" in params else x
    return jnp.maximum(out + identity, 0.0)


# -------------------------------------------------------------------------------- main


if __name__ == "__main__":
    key = jax.random.PRNGKey(0)
    kx1, kx2, kx3, kx4, kp1, kp2, kp3, kp4 = jax.random.split(key, 8)

    # Case 1: projected shortcut, bf16 weights (default), fused [W1|Ws] kernel.
    B, in_dim, out_dim = 8, 32, 64
    x = jax.random.normal(kx1, (B, in_dim), jnp.float32)
    params = init_params(kp1, in_dim, out_dim)
    y = jax.block_until_ready(residual_block(x, prepare_params(params)))
    assert y.shape == (B, out_dim)
    assert jnp.allclose(y, residual_block_ref(x, params), atol=8e-2, rtol=8e-2)

    # Case 2: identity shortcut, f32 weights, multi-step batch grid (TB=8 -> grid (3,)).
    B2, dim2 = 24, 64
    x2 = jax.random.normal(kx2, (B2, dim2), jnp.float32)
    params2 = init_params(kp2, dim2, dim2)
    y2 = jax.block_until_ready(
        residual_block(x2, prepare_params(params2, compute_dtype=jnp.float32)))
    assert y2.shape == (B2, dim2)
    assert jnp.allclose(y2, residual_block_ref(x2, params2), atol=1e-4, rtol=1e-4)

    # Case 3: projected shortcut through the forced N-tiled path (grid (3, 2)), f32
    # weights, partial last batch block handled by the grid (no batch padding).
    B3, in3, out3 = 20, 72, 200
    x3 = jax.random.normal(kx3, (B3, in3), jnp.float32)
    params3 = init_params(kp3, in3, out3)
    y3 = jax.block_until_ready(residual_block(
        x3, prepare_params(params3, compute_dtype=jnp.float32), n_tile=128))
    assert y3.shape == (B3, out3)
    assert jnp.allclose(y3, residual_block_ref(x3, params3), atol=1e-4, rtol=1e-4)

    # Case 4: identity shortcut through the N-tiled path (x column-tile residual).
    B4, dim4 = 16, 256
    x4 = jax.random.normal(kx4, (B4, dim4), jnp.float32)
    params4 = init_params(kp4, dim4, dim4)
    y4 = jax.block_until_ready(residual_block(
        x4, prepare_params(params4, compute_dtype=jnp.float32), n_tile=128))
    assert y4.shape == (B4, dim4)
    assert jnp.allclose(y4, residual_block_ref(x4, params4), atol=1e-4, rtol=1e-4)

    print("KERNEL_OK")
</pallas_src>

<mosaic_0001>
module attributes {stable_mosaic.version = 11 : i64} {
  func.func @_resblock_fused_kernel(%arg0: i32, %arg1: memref<8x128xf32, #tpu.memory_space<vmem>>, %arg2: memref<128x256xbf16, #tpu.memory_space<vmem>>, %arg3: memref<1x256xf32, #tpu.memory_space<vmem>>, %arg4: memref<128x128xbf16, #tpu.memory_space<vmem>>, %arg5: memref<1x128xf32, #tpu.memory_space<vmem>>, %arg6: memref<8x128xf32, #tpu.memory_space<vmem>>) attributes {dimension_semantics = [#tpu.dimension_semantics<parallel>], iteration_bounds = array<i64: 1>, scalar_prefetch = 0 : i64, scratch_operands = 0 : i64, tpu.core_type = #tpu.core_type<tc>, window_params = [{transform_indices = @transform_0, window_bounds = array<i64: 8, 128>}, {pipeline_mode = #tpu.pipeline_mode<synchronous>, transform_indices = @transform_1, window_bounds = array<i64: 128, 256>}, {pipeline_mode = #tpu.pipeline_mode<synchronous>, transform_indices = @transform_2, window_bounds = array<i64: 1, 256>}, {pipeline_mode = #tpu.pipeline_mode<synchronous>, transform_indices = @transform_3, window_bounds = array<i64: 128, 128>}, {pipeline_mode = #tpu.pipeline_mode<synchronous>, transform_indices = @transform_4, window_bounds = array<i64: 1, 128>}, {transform_indices = @transform_5, window_bounds = array<i64: 8, 128>}]} {
    %c0 = arith.constant 0 : index
    %c0_0 = arith.constant 0 : index
    %0 = vector.load %arg1[%c0, %c0_0] : memref<8x128xf32, #tpu.memory_space<vmem>>, vector<8x128xf32>
    %1 = arith.truncf %0 : vector<8x128xf32> to vector<8x128xbf16>
    %c0_1 = arith.constant 0 : index
    %c0_2 = arith.constant 0 : index
    %2 = vector.load %arg2[%c0_1, %c0_2] : memref<128x256xbf16, #tpu.memory_space<vmem>>, vector<128x256xbf16>
    %cst = arith.constant dense<0.000000e+00> : vector<8x256xf32>
    %3 = tpu.matmul %1, %2, %cst {dimension_numbers = #tpu.dot_dimension_numbers<[1], [0], [0], [1], [0, 0, 1, 1], [], []>} : vector<8x128xbf16>, vector<128x256xbf16>, vector<8x256xf32> -> vector<8x256xf32>
    %c0_3 = arith.constant 0 : index
    %c0_4 = arith.constant 0 : index
    %4 = vector.load %arg3[%c0_3, %c0_4] : memref<1x256xf32, #tpu.memory_space<vmem>>, vector<1x256xf32>
    %5 = vector.broadcast %4 : vector<1x256xf32> to vector<8x256xf32>
    %6 = arith.addf %3, %5 : vector<8x256xf32>
    %7 = vector.extract_strided_slice %6 {offsets = [0, 0], sizes = [8, 128], strides = [1, 1]} : vector<8x256xf32> to vector<8x128xf32>
    %cst_5 = arith.constant 0.000000e+00 : f32
    %8 = vector.broadcast %cst_5 : f32 to vector<8x128xf32>
    %9 = arith.maximumf %7, %8 : vector<8x128xf32>
    %10 = vector.extract_strided_slice %6 {offsets = [0, 128], sizes = [8, 128], strides = [1, 1]} : vector<8x256xf32> to vector<8x128xf32>
    %11 = arith.truncf %9 : vector<8x128xf32> to vector<8x128xbf16>
    %c0_6 = arith.constant 0 : index
    %c0_7 = arith.constant 0 : index
    %12 = vector.load %arg4[%c0_6, %c0_7] : memref<128x128xbf16, #tpu.memory_space<vmem>>, vector<128x128xbf16>
    %cst_8 = arith.constant dense<0.000000e+00> : vector<8x128xf32>
    %13 = tpu.matmul %11, %12, %cst_8 {dimension_numbers = #tpu.dot_dimension_numbers<[1], [0], [0], [1], [0, 0, 1, 1], [], []>} : vector<8x128xbf16>, vector<128x128xbf16>, vector<8x128xf32> -> vector<8x128xf32>
    %c0_9 = arith.constant 0 : index
    %c0_10 = arith.constant 0 : index
    %14 = vector.load %arg5[%c0_9, %c0_10] : memref<1x128xf32, #tpu.memory_space<vmem>>, vector<1x128xf32>
    %15 = vector.broadcast %14 : vector<1x128xf32> to vector<8x128xf32>
    %16 = arith.addf %13, %15 : vector<8x128xf32>
    %17 = arith.addf %16, %10 : vector<8x128xf32>
    %cst_11 = arith.constant 0.000000e+00 : f32
    %18 = vector.broadcast %cst_11 : f32 to vector<8x128xf32>
    %19 = arith.maximumf %17, %18 : vector<8x128xf32>
    %c0_12 = arith.constant 0 : index
    %c0_13 = arith.constant 0 : index
    %20 = vector.load %arg6[%c0_12, %c0_13] : memref<8x128xf32, #tpu.memory_space<vmem>>, vector<8x128xf32>
    tpu.vector_store %arg6[%c0_12, %c0_13], %19 {strides = array<i32>} : memref<8x128xf32, #tpu.memory_space<vmem>>, vector<8x128xf32>,
    return
  }
  func.func @transform_0(%arg0: i32) -> (i32, i32) {
    %c0_i32 = arith.constant 0 : i32
    %c0_i32_0 = arith.constant 0 : i32
    return %arg0, %c0_i32 : i32, i32
  }
  func.func @transform_1(%arg0: i32) -> (i32, i32) {
    %c0_i32 = arith.constant 0 : i32
    %c0_i32_0 = arith.constant 0 : i32
    %c0_i32_1 = arith.constant 0 : i32
    return %c0_i32, %c0_i32_0 : i32, i32
  }
  func.func @transform_2(%arg0: i32) -> (i32, i32) {
    %c0_i32 = arith.constant 0 : i32
    %c0_i32_0 = arith.constant 0 : i32
    %c0_i32_1 = arith.constant 0 : i32
    return %c0_i32, %c0_i32_0 : i32, i32
  }
  func.func @transform_3(%arg0: i32) -> (i32, i32) {
    %c0_i32 = arith.constant 0 : i32
    %c0_i32_0 = arith.constant 0 : i32
    %c0_i32_1 = arith.constant 0 : i32
    return %c0_i32, %c0_i32_0 : i32, i32
  }
  func.func @transform_4(%arg0: i32) -> (i32, i32) {
    %c0_i32 = arith.constant 0 : i32
    %c0_i32_0 = arith.constant 0 : i32
    %c0_i32_1 = arith.constant 0 : i32
    return %c0_i32, %c0_i32_0 : i32, i32
  }
  func.func @transform_5(%arg0: i32) -> (i32, i32) {
    %c0_i32 = arith.constant 0 : i32
    %c0_i32_0 = arith.constant 0 : i32
    return %arg0, %c0_i32 : i32, i32
  }
}

</mosaic_0001>

<llo_original>
// kernel: tpu_custom_call.1
$region0: #{tpu_custom_call.1}
  #allocation0 [shape = 'u32[]', space=smem, size = 0x4, offset = 0x4, fixed_abs, tag = 'smem constant byte address 0x4 - core index']
  #allocation1 [shape = 'u32[144,128]{1,0:T(1,128)}', space=vmem, size = 0x12000, scoped, tag = 'internal scratch']
  %s0 = inlined_call_operand.hbm [shape: f32[8,128], index: 0, kind: input, shape index: {}]
  %s1 = inlined_call_operand.hbm [shape: bf16[128,256], index: 1, kind: input, shape index: {}]
  %s2 = inlined_call_operand.vmem [shape: f32[1,256], index: 2, kind: input, shape index: {}]
  %s3 = inlined_call_operand.hbm [shape: bf16[128,128], index: 3, kind: input, shape index: {}]
  %s4 = inlined_call_operand.vmem [shape: f32[1,128], index: 4, kind: input, shape index: {}]
  %s5 = inlined_call_operand.hbm [shape: f32[8,128], index: 5, kind: output, shape index: {}]
  %s6 = sld [smem:[#allocation0]]
  $region42: #{tpu_custom_call.1} parent=0
    _
  %s8 = ssub.s32 1, %s6
  %s9 = scalar_select 0, %s8, %s6
  $region1: #{tpu_custom_call.1} parent=0
    #allocation2 [shape = 'u8[4096]{0}', space=vmem, size = 0x1000, scoped, tag = 'input window, operand 0, single buffered']
    #allocation3 [shape = 's32[1]{0}', space=sflag, size = 0x4, scoped, tag = 'scoped memory for tpu_custom_call.1']
    #allocation4 [shape = 's32[1]{0}', space=sflag, size = 0x4, scoped, tag = 'scoped memory for tpu_custom_call.1']
    #allocation5 [shape = 'u8[65536]{0}', space=vmem, size = 0x10000, scoped, tag = 'input window, operand 1, single buffered']
    #allocation6 [shape = 's32[1]{0}', space=sflag, size = 0x4, scoped, tag = 'scoped memory for tpu_custom_call.1']
    #allocation7 [shape = 'u8[32768]{0}', space=vmem, size = 0x8000, scoped, tag = 'input window, operand 3, single buffered']
    #allocation8 [shape = 'u8[4096]{0}', space=vmem, size = 0x1000, scoped, tag = 'output window, operand 0, single buffered']
    %10 = vsyncpa [#allocation3], 0
    %11 = vsyncpa [#allocation6], 0
    %12 = vsyncpa [#allocation4], 0
    // Predicated region
    $region2: #{tpu_custom_call.1} parent=1 // pred_check
      _
    $region3: #{tpu_custom_call.1} parent=1 // pred_check_branch
      %14 = sbr.rel (0) target = $region5
    $region4: #{tpu_custom_call.1} parent=1 // pred_region
      %s16 = ssub.s32 128, 128
      %17 = vsyncadd [#allocation3], %s16
      %s19 = sshll.u32 [#allocation2], 4
      %s20 = int_to_ptr.vmem [resolvable:$true] %s19
      %22 = dma.hbm_to_vmem [thread:$0]  %s0, 128, %s20, [#allocation3]
    $region5: #{tpu_custom_call.1} parent=1 // pred_fallthru
      _
    // Predicated region
    $region6: #{tpu_custom_call.1} parent=1 // pred_check
      _
    $region7: #{tpu_custom_call.1} parent=1 // pred_check_branch
      %24 = sbr.rel (0) target = $region9
    $region8: #{tpu_custom_call.1} parent=1 // pred_region
      %s26 = ssub.s32 2048, 2048
      %27 = vsyncadd [#allocation6], %s26
      %s28 = sshll.u32 [#allocation5], 4
      %s29 = int_to_ptr.vmem [resolvable:$true] %s28
      %34 = dma.hbm_to_vmem [thread:$0]  %s1, 2048, %s29, [#allocation6], 128, 128, 8
    $region9: #{tpu_custom_call.1} parent=1 // pred_fallthru
      _
    // Predicated region
    $region10: #{tpu_custom_call.1} parent=1 // pred_check
      _
    $region11: #{tpu_custom_call.1} parent=1 // pred_check_branch
      %36 = sbr.rel (0) target = $region13
    $region12: #{tpu_custom_call.1} parent=1 // pred_region
      _
    $region13: #{tpu_custom_call.1} parent=1 // pred_fallthru
      _
    // Predicated region
    $region14: #{tpu_custom_call.1} parent=1 // pred_check
      _
    $region15: #{tpu_custom_call.1} parent=1 // pred_check_branch
      %38 = sbr.rel (0) target = $region17
    $region16: #{tpu_custom_call.1} parent=1 // pred_region
      %s40 = ssub.s32 1024, 1024
      %41 = vsyncadd [#allocation6], %s40
      %s42 = sshll.u32 [#allocation7], 4
      %s43 = int_to_ptr.vmem [resolvable:$true] %s42
      %48 = dma.hbm_to_vmem [thread:$0]  %s3, 1024, %s43, [#allocation6], 64, 64, 4
    $region17: #{tpu_custom_call.1} parent=1 // pred_fallthru
      _
    // Predicated region
    $region18: #{tpu_custom_call.1} parent=1 // pred_check
      _
    $region19: #{tpu_custom_call.1} parent=1 // pred_check_branch
      %50 = sbr.rel (0) target = $region21
    $region20: #{tpu_custom_call.1} parent=1 // pred_region
      _
    $region21: #{tpu_custom_call.1} parent=1 // pred_fallthru
      _
    // Predicated region
    $region22: #{tpu_custom_call.1} parent=1 // pred_check
      _
    $region23: #{tpu_custom_call.1} parent=1 // pred_check_branch
      %52 = sbr.rel (0) target = $region25
    $region24: #{tpu_custom_call.1} parent=1 // pred_region
      %53 = dma.done [#allocation3], 128
    $region25: #{tpu_custom_call.1} parent=1 // pred_fallthru
      _
    // Predicated region
    $region26: #{tpu_custom_call.1} parent=1 // pred_check
      _
    $region27: #{tpu_custom_call.1} parent=1 // pred_check_branch
      %55 = sbr.rel (0) target = $region29
    $region28: #{tpu_custom_call.1} parent=1 // pred_region
      %56 = dma.done [#allocation6], 2048
    $region29: #{tpu_custom_call.1} parent=1 // pred_fallthru
      _
    // Predicated region
    $region30: #{tpu_custom_call.1} parent=1 // pred_check
      _
    $region31: #{tpu_custom_call.1} parent=1 // pred_check_branch
      %58 = sbr.rel (0) target = $region33
    $region32: #{tpu_custom_call.1} parent=1 // pred_region
      %59 = dma.done [#allocation6], 1024
    $region33: #{tpu_custom_call.1} parent=1 // pred_fallthru
      _
    %v61 = vld [vmem:[#allocation2] sm:$0xff]
    %v62 = vpack.c.bf16 %v61, %v61
    %v63 = vld [vmem:[#allocation5] sm:$0xff]
    %v64 = vld [vmem:[#allocation5 + $0x8] sm:$0xff]
    %v65 = vld [vmem:[#allocation5 + $0x10] sm:$0xff]
    %v66 = vld [vmem:[#allocation5 + $0x18] sm:$0xff]
    %v67 = vld [vmem:[#allocation5 + $0x20] sm:$0xff]
    %v68 = vld [vmem:[#allocation5 + $0x28] sm:$0xff]
    %v69 = vld [vmem:[#allocation5 + $0x30] sm:$0xff]
    %v70 = vld [vmem:[#allocation5 + $0x38] sm:$0xff]
    %v71 = vld [vmem:[#allocation5 + $0x40] sm:$0xff]
    %v72 = vld [vmem:[#allocation5 + $0x48] sm:$0xff]
    %v73 = vld [vmem:[#allocation5 + $0x50] sm:$0xff]
    %v74 = vld [vmem:[#allocation5 + $0x58] sm:$0xff]
    %v75 = vld [vmem:[#allocation5 + $0x60] sm:$0xff]
    %v76 = vld [vmem:[#allocation5 + $0x68] sm:$0xff]
    %v77 = vld [vmem:[#allocation5 + $0x70] sm:$0xff]
    %v78 = vld [vmem:[#allocation5 + $0x78] sm:$0xff]
    %v79 = vld [vmem:[%s2] sm:$0x3]
    %v81 = vlaneseq
    %v82 = vshrl.u32 %v81, 7
    %v83 = vsub.s32 0, %v82
    %v84 = vrot.slane %v79, %v83
    %v85 = vlaneseq
    %v86 = vshrl.u32 %v85, 7
    %v87 = vsub.s32 1, %v86
    %v88 = vrot.slane %v79, %v87
    %v107 = vunpack.c.l.b16 %v63
    %v108 = vunpack.c.h.b16 %v63
    %v109 = vunpack.c.l.b16 %v64
    %v110 = vunpack.c.h.b16 %v64
    %v111 = vunpack.c.l.b16 %v65
    %v112 = vunpack.c.h.b16 %v65
    %v113 = vunpack.c.l.b16 %v66
    %v114 = vunpack.c.h.b16 %v66
    %v115 = vunpack.c.l.b16 %v67
    %v116 = vunpack.c.h.b16 %v67
    %v117 = vunpack.c.l.b16 %v68
    %v118 = vunpack.c.h.b16 %v68
    %v119 = vunpack.c.l.b16 %v69
    %v120 = vunpack.c.h.b16 %v69
    %v121 = vunpack.c.l.b16 %v70
    %v122 = vunpack.c.h.b16 %v70
    %v123 = vunpack.c.l.b16 %v71
    %v124 = vunpack.c.h.b16 %v71
    %v125 = vunpack.c.l.b16 %v72
    %v126 = vunpack.c.h.b16 %v72
    %v127 = vunpack.c.l.b16 %v73
    %v128 = vunpack.c.h.b16 %v73
    %v129 = vunpack.c.l.b16 %v74
    %v130 = vunpack.c.h.b16 %v74
    %v131 = vunpack.c.l.b16 %v75
    %v132 = vunpack.c.h.b16 %v75
    %v133 = vunpack.c.l.b16 %v76
    %v134 = vunpack.c.h.b16 %v76
    %v135 = vunpack.c.l.b16 %v77
    %v136 = vunpack.c.h.b16 %v77
    %v137 = vunpack.c.l.b16 %v78
    %v138 = vunpack.c.h.b16 %v78
    %v139 = vpack.c.b16 %v109, %v107
    %v140 = vpack.c.b16 %v110, %v108
    %v141 = vpack.c.b16 %v113, %v111
    %v142 = vpack.c.b16 %v114, %v112
    %v143 = vpack.c.b16 %v117, %v115
    %v144 = vpack.c.b16 %v118, %v116
    %v145 = vpack.c.b16 %v121, %v119
    %v146 = vpack.c.b16 %v122, %v120
    %v147 = vpack.c.b16 %v125, %v123
    %v148 = vpack.c.b16 %v126, %v124
    %v149 = vpack.c.b16 %v129, %v127
    %v150 = vpack.c.b16 %v130, %v128
    %v151 = vpack.c.b16 %v133, %v131
    %v152 = vpack.c.b16 %v134, %v132
    %v153 = vpack.c.b16 %v137, %v135
    %v154 = vpack.c.b16 %v138, %v136
    %171 = vmatprep.subr.bf16.mxu0 %v140
    %172 = vmatpush1.bf16.msra.mxu0 %v139
    %173 = vmatprep.subr.bf16.mxu0 %v142
    %174 = vmatpush1.bf16.msra.mxu0 %v141
    %175 = vmatprep.subr.bf16.mxu0 %v144
    %176 = vmatpush1.bf16.msra.mxu0 %v143
    %177 = vmatprep.subr.bf16.mxu0 %v146
    %178 = vmatpush1.bf16.msra.mxu0 %v145
    %179 = vmatprep.subr.bf16.mxu0 %v148
    %180 = vmatpush1.bf16.msra.mxu0 %v147
    %181 = vmatprep.subr.bf16.mxu0 %v150
    %182 = vmatpush1.bf16.msra.mxu0 %v149
    %183 = vmatprep.subr.bf16.mxu0 %v152
    %184 = vmatpush1.bf16.msra.mxu0 %v151
    %185 = vmatprep.subr.bf16.mxu0 %v154
    %186 = vmatpush1.bf16.msra.mxu0 %v153
    %187 = vmatprep.subr.bf16.mxu0 0
    %188 = vmatpush1.bf16.msra.mxu0 0
    %189 = vmatprep.subr.bf16.mxu0 0
    %190 = vmatpush1.bf16.msra.mxu0 0
    %191 = vmatprep.subr.bf16.mxu0 0
    %192 = vmatpush1.bf16.msra.mxu0 0
    %193 = vmatprep.subr.bf16.mxu0 0
    %194 = vmatpush1.bf16.msra.mxu0 0
    %195 = vmatprep.subr.bf16.mxu0 0
    %196 = vmatpush1.bf16.msra.mxu0 0
    %197 = vmatprep.subr.bf16.mxu0 0
    %198 = vmatpush1.bf16.msra.mxu0 0
    %199 = vmatprep.subr.bf16.mxu0 0
    %200 = vmatpush1.bf16.msra.mxu0 0
    %201 = vmatprep.subr.bf16.mxu0 0
    %202 = vmatpush1.bf16.msra.mxu0 0
    %203 = vmatprep.mubr.bf16.mxu0 0
    %204 = vmatmul.mubr.bf16.gmra.mrb[0].mxu0 %v62
    %v205 = vpop.f32.mrb[0].mxu0
    %v206 = vadd.f32 %v84, %v205
    %v207 = vpop.f32.mrb[0].mxu0
    %v208 = vadd.f32 %v88, %v207
    %v209 = vpop.f32.mrb[0].mxu0
    %v210 = vpop.f32.mrb[0].mxu0
    %211 = vdwg.mxu0
    %v212 = vmax.f32 %v206, 0.0
    %v213 = vpack.c.bf16 %v212, %v212
    %v214 = vld [vmem:[#allocation7] sm:$0xf]
    %v215 = vld [vmem:[#allocation7 + $0x4] sm:$0xf]
    %v216 = vld [vmem:[#allocation7 + $0x8] sm:$0xf]
    %v217 = vld [vmem:[#allocation7 + $0xc] sm:$0xf]
    %v218 = vld [vmem:[#allocation7 + $0x10] sm:$0xf]
    %v219 = vld [vmem:[#allocation7 + $0x14] sm:$0xf]
    %v220 = vld [vmem:[#allocation7 + $0x18] sm:$0xf]
    %v221 = vld [vmem:[#allocation7 + $0x1c] sm:$0xf]
    %v222 = vld [vmem:[#allocation7 + $0x20] sm:$0xf]
    %v223 = vld [vmem:[#allocation7 + $0x24] sm:$0xf]
    %v224 = vld [vmem:[#allocation7 + $0x28] sm:$0xf]
    %v225 = vld [vmem:[#allocation7 + $0x2c] sm:$0xf]
    %v226 = vld [vmem:[#allocation7 + $0x30] sm:$0xf]
    %v227 = vld [vmem:[#allocation7 + $0x34] sm:$0xf]
    %v228 = vld [vmem:[#allocation7 + $0x38] sm:$0xf]
    %v229 = vld [vmem:[#allocation7 + $0x3c] sm:$0xf]
    %v230 = vld [vmem:[%s4] sm:$0x1]
    %v232 = vlaneseq
    %v233 = vshrl.u32 %v232, 7
    %v234 = vsub.s32 0, %v233
    %v235 = vrot.slane %v230, %v234
    %v253 = vunpack.c.l.b16 %v214
    %v254 = vunpack.c.l.b16 %v215
    %v255 = vunpack.c.l.b16 %v216
    %v256 = vunpack.c.l.b16 %v217
    %v257 = vunpack.c.l.b16 %v218
    %v258 = vunpack.c.l.b16 %v219
    %v259 = vunpack.c.l.b16 %v220
    %v260 = vunpack.c.l.b16 %v221
    %v261 = vunpack.c.l.b16 %v222
    %v262 = vunpack.c.l.b16 %v223
    %v263 = vunpack.c.l.b16 %v224
    %v264 = vunpack.c.l.b16 %v225
    %v265 = vunpack.c.l.b16 %v226
    %v266 = vunpack.c.l.b16 %v227
    %v267 = vunpack.c.l.b16 %v228
    %v268 = vunpack.c.l.b16 %v229
    %v269 = vpack.c.b16 %v254, %v253
    %v270 = vpack.c.b16 %v256, %v255
    %v271 = vpack.c.b16 %v258, %v257
    %v272 = vpack.c.b16 %v260, %v259
    %v273 = vpack.c.b16 %v262, %v261
    %v274 = vpack.c.b16 %v264, %v263
    %v275 = vpack.c.b16 %v266, %v265
    %v276 = vpack.c.b16 %v268, %v267
    %285 = vmatprep.subr.bf16.mxu0 0
    %286 = vmatpush1.bf16.msra.mxu0 %v269
    %287 = vmatprep.subr.bf16.mxu0 0
    %288 = vmatpush1.bf16.msra.mxu0 %v270
    %289 = vmatprep.subr.bf16.mxu0 0
    %290 = vmatpush1.bf16.msra.mxu0 %v271
    %291 = vmatprep.subr.bf16.mxu0 0
    %292 = vmatpush1.bf16.msra.mxu0 %v272
    %293 = vmatprep.subr.bf16.mxu0 0
    %294 = vmatpush1.bf16.msra.mxu0 %v273
    %295 = vmatprep.subr.bf16.mxu0 0
    %296 = vmatpush1.bf16.msra.mxu0 %v274
    %297 = vmatprep.subr.bf16.mxu0 0
    %298 = vmatpush1.bf16.msra.mxu0 %v275
    %299 = vmatprep.subr.bf16.mxu0 0
    %300 = vmatpush1.bf16.msra.mxu0 %v276
    %301 = vmatprep.subr.bf16.mxu0 0
    %302 = vmatpush1.bf16.msra.mxu0 0
    %303 = vmatprep.subr.bf16.mxu0 0
    %304 = vmatpush1.bf16.msra.mxu0 0
    %305 = vmatprep.subr.bf16.mxu0 0
    %306 = vmatpush1.bf16.msra.mxu0 0
    %307 = vmatprep.subr.bf16.mxu0 0
    %308 = vmatpush1.bf16.msra.mxu0 0
    %309 = vmatprep.subr.bf16.mxu0 0
    %310 = vmatpush1.bf16.msra.mxu0 0
    %311 = vmatprep.subr.bf16.mxu0 0
    %312 = vmatpush1.bf16.msra.mxu0 0
    %313 = vmatprep.subr.bf16.mxu0 0
    %314 = vmatpush1.bf16.msra.mxu0 0
    %315 = vmatprep.subr.bf16.mxu0 0
    %316 = vmatpush1.bf16.msra.mxu0 0
    %317 = vmatprep.mubr.bf16.mxu0 0
    %318 = vmatmul.mubr.bf16.gmra.mrb[0].mxu0 %v213
    %v319 = vpop.f32.mrb[0].mxu0
    %v320 = vadd.f32 %v235, %v319
    %v321 = vpop.f32.mrb[0].mxu0
    %v322 = vpop.f32.mrb[0].mxu0
    %v323 = vpop.f32.mrb[0].mxu0
    %324 = vdwg.mxu0
    %v325 = vadd.f32 %v320, %v208
    %v326 = vmax.f32 %v325, 0.0
    %327 = vst [vmem:[#allocation8] sm:$0xff] %v326
    // Predicated region
    $region34: #{tpu_custom_call.1} parent=1 // pred_check
      _
    $region35: #{tpu_custom_call.1} parent=1 // pred_check_branch
      %329 = sbr.rel (0) target = $region37
    $region36: #{tpu_custom_call.1} parent=1 // pred_region
      %s331 = ssub.s32 128, 128
      %332 = vsyncadd [#allocation4], %s331
      %s334 = sshll.u32 [#allocation8], 4
      %s335 = int_to_ptr.vmem [resolvable:$true] %s334
      %337 = dma.vmem_to_hbm [thread:$0]  %s335, 128, %s5, [#allocation4]
    $region37: #{tpu_custom_call.1} parent=1 // pred_fallthru
      _
    // Predicated region
    $region38: #{tpu_custom_call.1} parent=1 // pred_check
      _
    $region39: #{tpu_custom_call.1} parent=1 // pred_check_branch
      %339 = sbr.rel (0) target = $region41
    $region40: #{tpu_custom_call.1} parent=1 // pred_region
      %340 = dma.done [#allocation4], 128
    $region41: #{tpu_custom_call.1} parent=1 // pred_fallthru
      _
    %341 = vsyncpa [#allocation3], 1
    %342 = vsyncpa [#allocation6], 1
    %343 = vsyncpa [#allocation4], 1

</llo_original>
